<compile_context>
chip_gen: v5e
topology: v5e:2x2
jax: 0.10.0
libtpu: 0.0.40
codegen_flags: <defaults>
</compile_context>

<pallas_src>
import jax
import jax.numpy as jnp
from jax.experimental import pallas as pl
from jax.experimental.pallas import tpu as pltpu

SLAB = 128  # rows per sub-table slab in the combined embedding table


# ---------------------------------------------------------------------------
# Kernel
# ---------------------------------------------------------------------------
def _social_embed_kernel(
    task_ref,      # scalar prefetch: (1,) int32 in SMEM
    ids_ref,       # (6, TN, 1) int32: [word, pos, hashtag, emoji, mention, url]
    table_ref,     # (6*SLAB, H) f32 combined embedding table (one slab/stream)
    task_tab_ref,  # (Tpad, H) f32 task embedding table
    gamma_ref,     # (1, H) f32
    beta_ref,      # (1, H) f32
    out_ref,       # (TN, H) f32
):
    tn, h = out_ref.shape

    # One narrow (TN, SLAB) lane iota shared by all six per-slab compares.
    col = jax.lax.broadcasted_iota(jnp.int32, (tn, SLAB), 1)

    def slab_hot(k, masked):
        ids = ids_ref[k]                              # (TN, 1)
        if masked:
            # Fold the (id != 0) mask into the id itself: poisoned ids select
            # no column, so no full-width AND and no post-matmul multiply.
            ids = jnp.where(ids != 0, ids, -1)
        return col == ids                             # (TN, SLAB) bool

    hots = [
        slab_hot(0, False),   # word
        slab_hot(1, False),   # position
        slab_hot(2, True),    # hashtag   (id == 0 -> no contribution)
        slab_hot(3, True),    # emoji
        slab_hot(4, True),    # mention
        slab_hot(5, True),    # url
    ]
    # Slabs are lane-aligned 128-wide pieces; concat is a layout-native stack.
    mh = jnp.concatenate(hots, axis=-1).astype(jnp.float32)   # (TN, 6*SLAB)

    # Single MXU matmul accumulates word + pos + hashtag + emoji + mention +
    # url contributions in one pass.
    emb = jnp.dot(mh, table_ref[...],
                  preferred_element_type=jnp.float32)          # (TN, H)

    # Task embedding: direct broadcast row-add (dynamic row read of the small
    # resident task table, index comes from the SMEM-prefetched scalar).
    emb = emb + task_tab_ref[pl.ds(task_ref[0], 1), :]         # (1, H) bcast

    # LayerNorm over hidden dim, eps = 1e-12 (biased variance, like torch).
    inv_h = jnp.float32(1.0 / h)
    s1 = jnp.sum(emb, axis=-1, keepdims=True)
    s2 = jnp.sum(emb * emb, axis=-1, keepdims=True)
    mean = s1 * inv_h
    var = jnp.maximum(s2 * inv_h - mean * mean, 0.0)           # clamp cancellation
    norm = (emb - mean) * jax.lax.rsqrt(var + 1e-12)
    out = norm * gamma_ref[...] + beta_ref[...]

    # Dropout: eval-mode identity.
    out_ref[...] = out.astype(out_ref.dtype)


# ---------------------------------------------------------------------------
# Wrapper
# ---------------------------------------------------------------------------
def _round_up(x, m):
    return ((x + m - 1) // m) * m


def social_token_embeddings(params, input_ids, hashtag_ids, emoji_ids,
                            mention_ids, url_flags, task_id):
    """params: dict of jnp arrays. id tensors: (B, S) int32. Returns (B, S, H)."""
    B, S = input_ids.shape
    H = params["word"].shape[1]
    N = B * S

    # Token tile: lane-dense output blocks, tokens on sublanes (TN % 8 == 0),
    # capped at 512, and chosen so the grid has >= 2 steps (v7x has 2 TCs and
    # the single grid axis is marked 'parallel').
    TN = min(512, max(8, _round_up(pl.cdiv(N, 2), 8)))
    N_pad = _round_up(N, TN)

    # position_ids default: arange(S) broadcast over batch.
    pos_ids = jnp.broadcast_to(jnp.arange(S, dtype=jnp.int32), (B, S))

    def flat(x):
        v = x.astype(jnp.int32).reshape(N)
        if N_pad > N:
            v = jnp.pad(v, (0, N_pad - N))            # pad tokens with id 0
        return v.reshape(N_pad, 1)

    # Single stacked id input: one DMA per grid step instead of six.
    ids = jnp.stack(
        [flat(input_ids), flat(pos_ids), flat(hashtag_ids),
         flat(emoji_ids), flat(mention_ids), flat(url_flags)],
        axis=0)                                        # (6, N_pad, 1)

    # Combined table: one 128-row slab per stream (word|pos|hashtag|emoji|
    # mention|url), each zero-padded to SLAB rows.
    names = ["word", "pos", "hashtag", "emoji", "mention", "url"]
    pieces = []
    for name in names:
        t = params[name].astype(jnp.float32)
        r = t.shape[0]
        # TODO(synk): production vocab (~50k) needs the DMA row-gather path.
        assert r <= SLAB, f"sub-table '{name}' ({r} rows) exceeds one slab"
        if r < SLAB:
            t = jnp.pad(t, ((0, SLAB - r), (0, 0)))
        pieces.append(t)
    table = jnp.concatenate(pieces, axis=0)            # (6*SLAB, H)

    # Small task table, padded to a sublane multiple for the dynamic row read.
    task_tab = params["task"].astype(jnp.float32)
    t_rows = _round_up(task_tab.shape[0], 8)
    if t_rows > task_tab.shape[0]:
        task_tab = jnp.pad(task_tab, ((0, t_rows - task_tab.shape[0]), (0, 0)))

    gamma = params["gamma"].reshape(1, H).astype(jnp.float32)
    beta = params["beta"].reshape(1, H).astype(jnp.float32)

    grid = (N_pad // TN,)
    out = pl.pallas_call(
        _social_embed_kernel,
        out_shape=jax.ShapeDtypeStruct((N_pad, H), jnp.float32),
        grid_spec=pltpu.PrefetchScalarGridSpec(
            num_scalar_prefetch=1,
            grid=grid,
            in_specs=[
                pl.BlockSpec((6, TN, 1), lambda i, t: (0, i, 0)),       # ids
                pl.BlockSpec((6 * SLAB, H), lambda i, t: (0, 0)),       # table
                pl.BlockSpec((t_rows, H), lambda i, t: (0, 0)),         # task
                pl.BlockSpec((1, H), lambda i, t: (0, 0)),              # gamma
                pl.BlockSpec((1, H), lambda i, t: (0, 0)),              # beta
            ],
            out_specs=pl.BlockSpec((TN, H), lambda i, t: (i, 0)),
        ),
        compiler_params=pltpu.CompilerParams(
            dimension_semantics=("parallel",),
        ),
    )(jnp.array([task_id], dtype=jnp.int32), ids, table, task_tab, gamma, beta)

    return out[:N].reshape(B, S, H)


# ---------------------------------------------------------------------------
# Pure-JAX reference (for verification)
# ---------------------------------------------------------------------------
def reference(params, input_ids, hashtag_ids, emoji_ids, mention_ids,
              url_flags, task_id):
    B, S = input_ids.shape
    emb = params["word"][input_ids] + params["pos"][jnp.arange(S)][None, :, :]
    for ids, name in [(hashtag_ids, "hashtag"), (emoji_ids, "emoji"),
                      (mention_ids, "mention"), (url_flags, "url")]:
        e = params[name][ids]
        m = (ids != 0).astype(jnp.float32)[..., None]
        emb = emb + e * m
    emb = emb + params["task"][task_id][None, None, :]
    mean = emb.mean(-1, keepdims=True)
    var = ((emb - mean) ** 2).mean(-1, keepdims=True)
    norm = (emb - mean) / jnp.sqrt(var + 1e-12)
    return norm * params["gamma"] + params["beta"]


# ---------------------------------------------------------------------------
# Main
# ---------------------------------------------------------------------------
if __name__ == "__main__":
    # Small, self-consistent config
    VOCAB = 128
    HIDDEN = 128
    MAX_POS = 16
    N_HASHTAG = 32
    N_EMOJI = 32
    N_MENTION = 100   # fixed in module
    N_URL = 10        # fixed in module
    N_TASKS = 7       # len(default task_types)
    B, S = 2, 8

    key = jax.random.PRNGKey(0)
    ks = jax.random.split(key, 12)

    def init_table(k, rows, cols):
        return (0.02 * jax.random.normal(k, (rows, cols))).astype(jnp.float32)

    params = {
        "word":    init_table(ks[0], VOCAB, HIDDEN),
        "pos":     init_table(ks[1], MAX_POS, HIDDEN),
        "hashtag": init_table(ks[2], N_HASHTAG, HIDDEN),
        "emoji":   init_table(ks[3], N_EMOJI, HIDDEN),
        "mention": init_table(ks[4], N_MENTION, HIDDEN),
        "url":     init_table(ks[5], N_URL, HIDDEN),
        "task":    init_table(ks[6], N_TASKS, HIDDEN),
        "gamma":   jnp.ones((HIDDEN,), jnp.float32),
        "beta":    jnp.zeros((HIDDEN,), jnp.float32),
    }

    input_ids = jax.random.randint(ks[7], (B, S), 0, VOCAB, dtype=jnp.int32)
    hashtag_ids = jax.random.randint(ks[8], (B, S), 0, N_HASHTAG, dtype=jnp.int32)
    emoji_ids = jax.random.randint(ks[9], (B, S), 0, N_EMOJI, dtype=jnp.int32)
    mention_ids = jax.random.randint(ks[10], (B, S), 0, N_MENTION, dtype=jnp.int32)
    url_flags = jax.random.randint(ks[11], (B, S), 0, 2, dtype=jnp.int32)
    task_id = 3

    out = social_token_embeddings(params, input_ids, hashtag_ids, emoji_ids,
                                  mention_ids, url_flags, task_id)
    out = jax.block_until_ready(out)

    ref = reference(params, input_ids, hashtag_ids, emoji_ids, mention_ids,
                    url_flags, task_id)
    assert out.shape == (B, S, HIDDEN)
    assert jnp.allclose(out, ref, atol=1e-4, rtol=1e-4), "mismatch vs reference"

    print("KERNEL_OK")
</pallas_src>

<mosaic_0001>
module attributes {stable_mosaic.version = 11 : i64} {
  func.func @_social_embed_kernel(%arg0: i32, %arg1: memref<1xi32, #tpu.memory_space<smem>>, %arg2: memref<6x8x1xi32, #tpu.memory_space<vmem>>, %arg3: memref<768x128xf32, #tpu.memory_space<vmem>>, %arg4: memref<8x128xf32, #tpu.memory_space<vmem>>, %arg5: memref<1x128xf32, #tpu.memory_space<vmem>>, %arg6: memref<1x128xf32, #tpu.memory_space<vmem>>, %arg7: memref<8x128xf32, #tpu.memory_space<vmem>>) attributes {dimension_semantics = [#tpu.dimension_semantics<parallel>], iteration_bounds = array<i64: 2>, scalar_prefetch = 1 : i64, scratch_operands = 0 : i64, tpu.core_type = #tpu.core_type<tc>, window_params = [{transform_indices = @transform_0, window_bounds = array<i64: 6, 8, 1>}, {pipeline_mode = #tpu.pipeline_mode<synchronous>, transform_indices = @transform_1, window_bounds = array<i64: 768, 128>}, {pipeline_mode = #tpu.pipeline_mode<synchronous>, transform_indices = @transform_2, window_bounds = array<i64: 8, 128>}, {pipeline_mode = #tpu.pipeline_mode<synchronous>, transform_indices = @transform_3, window_bounds = array<i64: 1, 128>}, {pipeline_mode = #tpu.pipeline_mode<synchronous>, transform_indices = @transform_4, window_bounds = array<i64: 1, 128>}, {transform_indices = @transform_5, window_bounds = array<i64: 8, 128>}]} {
    %0 = tpu.iota {dimensions = array<i32: 1>} : vector<8x128xi32>
    %c0 = arith.constant 0 : index
    %c0_0 = arith.constant 0 : index
    %c0_1 = arith.constant 0 : index
    %1 = vector.load %arg2[%c0, %c0_0, %c0_1] : memref<6x8x1xi32, #tpu.memory_space<vmem>>, vector<1x8x1xi32>
    %2 = vector.shape_cast %1 : vector<1x8x1xi32> to vector<8x1xi32>
    %3 = vector.broadcast %2 : vector<8x1xi32> to vector<8x128xi32>
    %4 = arith.cmpi eq, %0, %3 : vector<8x128xi32>
    %c1 = arith.constant 1 : index
    %c0_2 = arith.constant 0 : index
    %c0_3 = arith.constant 0 : index
    %5 = vector.load %arg2[%c1, %c0_2, %c0_3] : memref<6x8x1xi32, #tpu.memory_space<vmem>>, vector<1x8x1xi32>
    %6 = vector.shape_cast %5 : vector<1x8x1xi32> to vector<8x1xi32>
    %7 = vector.broadcast %6 : vector<8x1xi32> to vector<8x128xi32>
    %8 = arith.cmpi eq, %0, %7 : vector<8x128xi32>
    %c2 = arith.constant 2 : index
    %c0_4 = arith.constant 0 : index
    %c0_5 = arith.constant 0 : index
    %9 = vector.load %arg2[%c2, %c0_4, %c0_5] : memref<6x8x1xi32, #tpu.memory_space<vmem>>, vector<1x8x1xi32>
    %10 = vector.shape_cast %9 : vector<1x8x1xi32> to vector<8x1xi32>
    %c0_i32 = arith.constant 0 : i32
    %11 = vector.broadcast %c0_i32 : i32 to vector<8x1xi32>
    %12 = arith.cmpi ne, %10, %11 : vector<8x1xi32>
    %c-1_i32 = arith.constant -1 : i32
    %13 = vector.broadcast %c-1_i32 : i32 to vector<8x1xi32>
    %14 = arith.select %12, %10, %13 : vector<8x1xi1>, vector<8x1xi32>
    %15 = vector.broadcast %14 : vector<8x1xi32> to vector<8x128xi32>
    %16 = arith.cmpi eq, %0, %15 : vector<8x128xi32>
    %c3 = arith.constant 3 : index
    %c0_6 = arith.constant 0 : index
    %c0_7 = arith.constant 0 : index
    %17 = vector.load %arg2[%c3, %c0_6, %c0_7] : memref<6x8x1xi32, #tpu.memory_space<vmem>>, vector<1x8x1xi32>
    %18 = vector.shape_cast %17 : vector<1x8x1xi32> to vector<8x1xi32>
    %c0_i32_8 = arith.constant 0 : i32
    %19 = vector.broadcast %c0_i32_8 : i32 to vector<8x1xi32>
    %20 = arith.cmpi ne, %18, %19 : vector<8x1xi32>
    %c-1_i32_9 = arith.constant -1 : i32
    %21 = vector.broadcast %c-1_i32_9 : i32 to vector<8x1xi32>
    %22 = arith.select %20, %18, %21 : vector<8x1xi1>, vector<8x1xi32>
    %23 = vector.broadcast %22 : vector<8x1xi32> to vector<8x128xi32>
    %24 = arith.cmpi eq, %0, %23 : vector<8x128xi32>
    %c4 = arith.constant 4 : index
    %c0_10 = arith.constant 0 : index
    %c0_11 = arith.constant 0 : index
    %25 = vector.load %arg2[%c4, %c0_10, %c0_11] : memref<6x8x1xi32, #tpu.memory_space<vmem>>, vector<1x8x1xi32>
    %26 = vector.shape_cast %25 : vector<1x8x1xi32> to vector<8x1xi32>
    %c0_i32_12 = arith.constant 0 : i32
    %27 = vector.broadcast %c0_i32_12 : i32 to vector<8x1xi32>
    %28 = arith.cmpi ne, %26, %27 : vector<8x1xi32>
    %c-1_i32_13 = arith.constant -1 : i32
    %29 = vector.broadcast %c-1_i32_13 : i32 to vector<8x1xi32>
    %30 = arith.select %28, %26, %29 : vector<8x1xi1>, vector<8x1xi32>
    %31 = vector.broadcast %30 : vector<8x1xi32> to vector<8x128xi32>
    %32 = arith.cmpi eq, %0, %31 : vector<8x128xi32>
    %c5 = arith.constant 5 : index
    %c0_14 = arith.constant 0 : index
    %c0_15 = arith.constant 0 : index
    %33 = vector.load %arg2[%c5, %c0_14, %c0_15] : memref<6x8x1xi32, #tpu.memory_space<vmem>>, vector<1x8x1xi32>
    %34 = vector.shape_cast %33 : vector<1x8x1xi32> to vector<8x1xi32>
    %c0_i32_16 = arith.constant 0 : i32
    %35 = vector.broadcast %c0_i32_16 : i32 to vector<8x1xi32>
    %36 = arith.cmpi ne, %34, %35 : vector<8x1xi32>
    %c-1_i32_17 = arith.constant -1 : i32
    %37 = vector.broadcast %c-1_i32_17 : i32 to vector<8x1xi32>
    %38 = arith.select %36, %34, %37 : vector<8x1xi1>, vector<8x1xi32>
    %39 = vector.broadcast %38 : vector<8x1xi32> to vector<8x128xi32>
    %40 = arith.cmpi eq, %0, %39 : vector<8x128xi32>
    %41 = tpu.concatenate %4, %8, %16, %24, %32, %40 in 1 : vector<8x128xi1>, vector<8x128xi1>, vector<8x128xi1>, vector<8x128xi1>, vector<8x128xi1>, vector<8x128xi1> -> vector<8x768xi1>
    %42 = arith.extui %41 : vector<8x768xi1> to vector<8x768xi32>
    %43 = arith.sitofp %42 : vector<8x768xi32> to vector<8x768xf32>
    %c0_18 = arith.constant 0 : index
    %c0_19 = arith.constant 0 : index
    %44 = vector.load %arg3[%c0_18, %c0_19] : memref<768x128xf32, #tpu.memory_space<vmem>>, vector<768x128xf32>
    %cst = arith.constant dense<0.000000e+00> : vector<8x128xf32>
    %45 = tpu.matmul %43, %44, %cst {dimension_numbers = #tpu.dot_dimension_numbers<[1], [0], [0], [1], [0, 0, 1, 1], [], []>} : vector<8x768xf32>, vector<768x128xf32>, vector<8x128xf32> -> vector<8x128xf32>
    %c0_20 = arith.constant 0 : index
    %46 = memref.load %arg1[%c0_20] : memref<1xi32, #tpu.memory_space<smem>>
    %47 = arith.index_cast %46 : i32 to index
    %c0_21 = arith.constant 0 : index
    %48 = vector.load %arg4[%47, %c0_21] : memref<8x128xf32, #tpu.memory_space<vmem>>, vector<1x128xf32>
    %49 = vector.broadcast %48 : vector<1x128xf32> to vector<8x128xf32>
    %50 = arith.addf %45, %49 : vector<8x128xf32>
    %cst_22 = arith.constant dense<0.000000e+00> : vector<8xf32>
    %51 = vector.multi_reduction <add>, %50, %cst_22 [1] : vector<8x128xf32> to vector<8xf32>
    %52 = vector.shape_cast %51 : vector<8xf32> to vector<8x1xf32>
    %53 = arith.mulf %50, %50 : vector<8x128xf32>
    %cst_23 = arith.constant dense<0.000000e+00> : vector<8xf32>
    %54 = vector.multi_reduction <add>, %53, %cst_23 [1] : vector<8x128xf32> to vector<8xf32>
    %55 = vector.shape_cast %54 : vector<8xf32> to vector<8x1xf32>
    %cst_24 = arith.constant 7.812500e-03 : f32
    %56 = vector.broadcast %cst_24 : f32 to vector<8x1xf32>
    %57 = arith.mulf %52, %56 : vector<8x1xf32>
    %cst_25 = arith.constant 7.812500e-03 : f32
    %58 = vector.broadcast %cst_25 : f32 to vector<8x1xf32>
    %59 = arith.mulf %55, %58 : vector<8x1xf32>
    %60 = arith.mulf %57, %57 : vector<8x1xf32>
    %61 = arith.subf %59, %60 : vector<8x1xf32>
    %cst_26 = arith.constant 0.000000e+00 : f32
    %62 = vector.broadcast %cst_26 : f32 to vector<8x1xf32>
    %63 = arith.maximumf %61, %62 : vector<8x1xf32>
    %64 = vector.broadcast %57 : vector<8x1xf32> to vector<8x128xf32>
    %65 = arith.subf %50, %64 : vector<8x128xf32>
    %cst_27 = arith.constant 9.99999996E-13 : f32
    %66 = vector.broadcast %cst_27 : f32 to vector<8x1xf32>
    %67 = arith.addf %63, %66 : vector<8x1xf32>
    %68 = math.rsqrt %67 : vector<8x1xf32>
    %69 = vector.broadcast %68 : vector<8x1xf32> to vector<8x128xf32>
    %70 = arith.mulf %65, %69 : vector<8x128xf32>
    %c0_28 = arith.constant 0 : index
    %c0_29 = arith.constant 0 : index
    %71 = vector.load %arg5[%c0_28, %c0_29] : memref<1x128xf32, #tpu.memory_space<vmem>>, vector<1x128xf32>
    %72 = vector.broadcast %71 : vector<1x128xf32> to vector<8x128xf32>
    %73 = arith.mulf %70, %72 : vector<8x128xf32>
    %c0_30 = arith.constant 0 : index
    %c0_31 = arith.constant 0 : index
    %74 = vector.load %arg6[%c0_30, %c0_31] : memref<1x128xf32, #tpu.memory_space<vmem>>, vector<1x128xf32>
    %75 = vector.broadcast %74 : vector<1x128xf32> to vector<8x128xf32>
    %76 = arith.addf %73, %75 : vector<8x128xf32>
    %c0_32 = arith.constant 0 : index
    %c0_33 = arith.constant 0 : index
    %77 = vector.load %arg7[%c0_32, %c0_33] : memref<8x128xf32, #tpu.memory_space<vmem>>, vector<8x128xf32>
    tpu.vector_store %arg7[%c0_32, %c0_33], %76 {strides = array<i32>} : memref<8x128xf32, #tpu.memory_space<vmem>>, vector<8x128xf32>,
    return
  }
  func.func @transform_0(%arg0: i32, %arg1: memref<1xi32, #tpu.memory_space<smem>>) -> (i32, i32, i32) {
    %c0_i32 = arith.constant 0 : i32
    %c0_i32_0 = arith.constant 0 : i32
    %c0_i32_1 = arith.constant 0 : i32
    return %c0_i32, %arg0, %c0_i32_0 : i32, i32, i32
  }
  func.func @transform_1(%arg0: i32, %arg1: memref<1xi32, #tpu.memory_space<smem>>) -> (i32, i32) {
    %c0_i32 = arith.constant 0 : i32
    %c0_i32_0 = arith.constant 0 : i32
    %c0_i32_1 = arith.constant 0 : i32
    return %c0_i32, %c0_i32_0 : i32, i32
  }
  func.func @transform_2(%arg0: i32, %arg1: memref<1xi32, #tpu.memory_space<smem>>) -> (i32, i32) {
    %c0_i32 = arith.constant 0 : i32
    %c0_i32_0 = arith.constant 0 : i32
    %c0_i32_1 = arith.constant 0 : i32
    return %c0_i32, %c0_i32_0 : i32, i32
  }
  func.func @transform_3(%arg0: i32, %arg1: memref<1xi32, #tpu.memory_space<smem>>) -> (i32, i32) {
    %c0_i32 = arith.constant 0 : i32
    %c0_i32_0 = arith.constant 0 : i32
    %c0_i32_1 = arith.constant 0 : i32
    return %c0_i32, %c0_i32_0 : i32, i32
  }
  func.func @transform_4(%arg0: i32, %arg1: memref<1xi32, #tpu.memory_space<smem>>) -> (i32, i32) {
    %c0_i32 = arith.constant 0 : i32
    %c0_i32_0 = arith.constant 0 : i32
    %c0_i32_1 = arith.constant 0 : i32
    return %c0_i32, %c0_i32_0 : i32, i32
  }
  func.func @transform_5(%arg0: i32, %arg1: memref<1xi32, #tpu.memory_space<smem>>) -> (i32, i32) {
    %c0_i32 = arith.constant 0 : i32
    %c0_i32_0 = arith.constant 0 : i32
    return %arg0, %c0_i32 : i32, i32
  }
}

</mosaic_0001>

<llo_original>
// kernel: tpu_custom_call.1
$region0: #{tpu_custom_call.1}
  #allocation0 [shape = 'u32[]', space=smem, size = 0x4, offset = 0x4, fixed_abs, tag = 'smem constant byte address 0x4 - core index']
  #allocation1 [shape = 'u32[72,128]{1,0:T(1,128)}', space=vmem, size = 0x9000, scoped, tag = 'internal scratch']
  #allocation2 [shape = 's32[1]{0}', space=sflag, size = 0x4, scoped, tag = 'scoped memory for tpu_custom_call.1']
  #allocation3 [shape = 's32[1]{0:T(128)S(6)}', space=smem, size = 0x200, scoped, tag = 'prefetched SMEM operand 0']
  %s0 = inlined_call_operand.<no memory space> [shape: s32[1], index: 0, kind: input, shape index: {}]
  %s1 = inlined_call_operand.vmem [shape: s32[6,16,1], index: 1, kind: input, shape index: {}]
  %s2 = inlined_call_operand.hbm [shape: f32[768,128], index: 2, kind: input, shape index: {}]
  %s3 = inlined_call_operand.vmem [shape: f32[8,128], index: 3, kind: input, shape index: {}]
  %s4 = inlined_call_operand.vmem [shape: f32[1,128], index: 4, kind: input, shape index: {}]
  %s5 = inlined_call_operand.vmem [shape: f32[1,128], index: 5, kind: input, shape index: {}]
  %s6 = inlined_call_operand.hbm [shape: f32[16,128], index: 6, kind: output, shape index: {}]
  %s7 = sld [smem:[#allocation0]]
  $region95: #{tpu_custom_call.1} parent=0
    _
  %s9 = ssub.s32 1, %s7
  %s10 = scalar_select 0, %s9, %s7
  %11 = sst [smem:[#allocation3]] %s0
  $region1: #{tpu_custom_call.1} parent=0
    #allocation4 [shape = 'u8[49152]{0}', space=vmem, size = 0xc000, scoped, tag = 'input window, operand 1']
    #allocation5 [shape = 'u8[393216]{0}', space=vmem, size = 0x60000, scoped, tag = 'input window, operand 2, single buffered']
    #allocation6 [shape = 's32[2]{0}', space=sflag, size = 0x8, scoped, tag = 'scoped memory for tpu_custom_call.1']
    #allocation7 [shape = 's32[2]{0}', space=sflag, size = 0x8, scoped, tag = 'scoped memory for tpu_custom_call.1']
    #allocation8 [shape = 'u8[8192]{0}', space=vmem, size = 0x2000, scoped, tag = 'output window, operand 0']
    %12 = vsyncpa [#allocation6], 0
    %13 = vsyncpa [#allocation7], 0
    %s14 = scalar_lea.sflag [#allocation7], 1
    %15 = vsyncpa %s14, 0
    loop: start=0, step=1, limit=4
    $region2: #{tpu_custom_call.1} parent=1 // loop_pre_header
      _
    $region3: #{tpu_custom_call.1} parent=1 // loop_header
      %s17 = sphi 0, %s21
      %p18 = scmp.ge.s32.totalorder %s17, 4
      %s27 = sphi 0, %s29
      %s30 = sphi 0, %s27
      %s31 = sphi 0, %s30
      %s47 = sphi 0, %s31
      %s51 = sphi 0, %s51
      %s53 = sphi 0, %s51
      %s54 = sphi 0, %s53
      %s68 = sphi 0, %s54
      %s72 = sphi 0, %s72
      %s74 = sphi 0, %s72
      %s75 = sphi 0, %s74
      %s89 = sphi 0, %s75
      %s93 = sphi 0, %s93
      %s95 = sphi 0, %s93
      %s96 = sphi 0, %s95
      %s110 = sphi 0, %s96
      %s114 = sphi 0, %s114
      %s116 = sphi 0, %s114
      %s117 = sphi 0, %s116
      %s131 = sphi 0, %s117
      %s137 = sphi 0, %s139
      %s140 = sphi 0, %s137
      %s141 = sphi 0, %s140
      %s157 = sphi 0, %s141
    $region4: #{tpu_custom_call.1} parent=1 // loop_header_branch
      %20 = sbr.rel (%p18) target = $region8
    $region5: #{tpu_custom_call.1} parent=1 // loop_body
      %s22 = ssub.s32 %s17, 1
      %s23 = ssub.s32 %s17, 2
      %s24 = sadd.s32 %s17, 1
      %s25 = ssub.s32 %s17, %s24
      %p26 = scmp.eq.s32.totalorder %s25, 0
      %s28 = sadd.s32 %s27, 1
      %s29 = scalar_select %p26, %s27, %s28
      %p32 = pneg %p26
      %p33 = scmp.eq.s32.totalorder %s17, 1
      %p34 = por %p32, %p33
      %p35 = scmp.ne.s32.totalorder %s27, %s30
      %p36 = scmp.eq.s32.totalorder %s17, 0
      %p37 = por %p35, %p36
      %p38 = scmp.ne.s32.totalorder %s27, %s30
      %p39 = scmp.eq.s32.totalorder %s22, 1
      %p40 = por %p38, %p39
      %p41 = scmp.ne.s32.totalorder %s30, %s31
      %p42 = scmp.eq.s32.totalorder %s22, 0
      %p43 = por %p41, %p42
      %p44 = scmp.ne.s32.totalorder %s30, %s31
      %p45 = scmp.eq.s32.totalorder %s23, 1
      %p46 = por %p44, %p45
      %p48 = scmp.ne.s32.totalorder %s31, %s47
      %p49 = scmp.eq.s32.totalorder %s23, 0
      %p50 = por %p48, %p49
      %s52 = sadd.s32 %s51, 1
      %p55 = scmp.eq.s32.totalorder %s17, 1
      %p56 = scmp.ne.s32.totalorder %s51, %s53
      %p57 = scmp.eq.s32.totalorder %s17, 0
      %p58 = por %p56, %p57
      %p59 = scmp.ne.s32.totalorder %s51, %s53
      %p60 = scmp.eq.s32.totalorder %s22, 1
      %p61 = por %p59, %p60
      %p62 = scmp.ne.s32.totalorder %s53, %s54
      %p63 = scmp.eq.s32.totalorder %s22, 0
      %p64 = por %p62, %p63
      %p65 = scmp.ne.s32.totalorder %s53, %s54
      %p66 = scmp.eq.s32.totalorder %s23, 1
      %p67 = por %p65, %p66
      %p69 = scmp.ne.s32.totalorder %s54, %s68
      %p70 = scmp.eq.s32.totalorder %s23, 0
      %p71 = por %p69, %p70
      %s73 = sadd.s32 %s72, 1
      %p76 = scmp.eq.s32.totalorder %s17, 1
      %p77 = scmp.ne.s32.totalorder %s72, %s74
      %p78 = scmp.eq.s32.totalorder %s17, 0
      %p79 = por %p77, %p78
      %p80 = scmp.ne.s32.totalorder %s72, %s74
      %p81 = scmp.eq.s32.totalorder %s22, 1
      %p82 = por %p80, %p81
      %p83 = scmp.ne.s32.totalorder %s74, %s75
      %p84 = scmp.eq.s32.totalorder %s22, 0
      %p85 = por %p83, %p84
      %p86 = scmp.ne.s32.totalorder %s74, %s75
      %p87 = scmp.eq.s32.totalorder %s23, 1
      %p88 = por %p86, %p87
      %p90 = scmp.ne.s32.totalorder %s75, %s89
      %p91 = scmp.eq.s32.totalorder %s23, 0
      %p92 = por %p90, %p91
      %s94 = sadd.s32 %s93, 1
      %p97 = scmp.eq.s32.totalorder %s17, 1
      %p98 = scmp.ne.s32.totalorder %s93, %s95
      %p99 = scmp.eq.s32.totalorder %s17, 0
      %p100 = por %p98, %p99
      %p101 = scmp.ne.s32.totalorder %s93, %s95
      %p102 = scmp.eq.s32.totalorder %s22, 1
      %p103 = por %p101, %p102
      %p104 = scmp.ne.s32.totalorder %s95, %s96
      %p105 = scmp.eq.s32.totalorder %s22, 0
      %p106 = por %p104, %p105
      %p107 = scmp.ne.s32.totalorder %s95, %s96
      %p108 = scmp.eq.s32.totalorder %s23, 1
      %p109 = por %p107, %p108
      %p111 = scmp.ne.s32.totalorder %s96, %s110
      %p112 = scmp.eq.s32.totalorder %s23, 0
      %p113 = por %p111, %p112
      %s115 = sadd.s32 %s114, 1
      %p118 = scmp.eq.s32.totalorder %s17, 1
      %p119 = scmp.ne.s32.totalorder %s114, %s116
      %p120 = scmp.eq.s32.totalorder %s17, 0
      %p121 = por %p119, %p120
      %p122 = scmp.ne.s32.totalorder %s114, %s116
      %p123 = scmp.eq.s32.totalorder %s22, 1
      %p124 = por %p122, %p123
      %p125 = scmp.ne.s32.totalorder %s116, %s117
      %p126 = scmp.eq.s32.totalorder %s22, 0
      %p127 = por %p125, %p126
      %p128 = scmp.ne.s32.totalorder %s116, %s117
      %p129 = scmp.eq.s32.totalorder %s23, 1
      %p130 = por %p128, %p129
      %p132 = scmp.ne.s32.totalorder %s117, %s131
      %p133 = scmp.eq.s32.totalorder %s23, 0
      %p134 = por %p132, %p133
      %s135 = ssub.s32 %s17, %s24
      %p136 = scmp.eq.s32.totalorder %s135, 0
      %s138 = sadd.s32 %s137, 1
      %s139 = scalar_select %p136, %s137, %s138
      %p142 = pneg %p136
      %p143 = scmp.eq.s32.totalorder %s17, 1
      %p144 = por %p142, %p143
      %p145 = scmp.ne.s32.totalorder %s137, %s140
      %p146 = scmp.eq.s32.totalorder %s17, 0
      %p147 = por %p145, %p146
      %p148 = scmp.ne.s32.totalorder %s137, %s140
      %p149 = scmp.eq.s32.totalorder %s22, 1
      %p150 = por %p148, %p149
      %p151 = scmp.ne.s32.totalorder %s140, %s141
      %p152 = scmp.eq.s32.totalorder %s22, 0
      %p153 = por %p151, %p152
      %p154 = scmp.ne.s32.totalorder %s140, %s141
      %p155 = scmp.eq.s32.totalorder %s23, 1
      %p156 = por %p154, %p155
      %p158 = scmp.ne.s32.totalorder %s141, %s157
      %p159 = scmp.eq.s32.totalorder %s23, 0
      %p160 = por %p158, %p159
      %p161 = scmp.le.s32.totalorder 1, %s17
      %p162 = scmp.lt.s32.totalorder %s17, 3
      %p163 = pnand %p161, %p162
      %p164 = pneg %p163
      // Predicated region
      $region9: #{tpu_custom_call.1} parent=5 // pred_check
        _
      $region10: #{tpu_custom_call.1} parent=5 // pred_check_branch
        %166 = sbr.rel (%p163) target = $region12
      $region11: #{tpu_custom_call.1} parent=5 // pred_region
        %s167 = ssub.s32 %s17, 1
        // Predicated region
        $region13: #{tpu_custom_call.1} parent=11 // pred_check
          %p168 = pneg %p64
        $region14: #{tpu_custom_call.1} parent=11 // pred_check_branch
          %170 = sbr.rel (%p168) target = $region16
        $region15: #{tpu_custom_call.1} parent=11 // pred_region
          %172 = vsyncadd [#allocation6], 0
          %s173 = sshll.u32 %s2, 4
          %s174 = int_to_ptr.hbm [resolvable:$true] %s173
          %s175 = sshll.u32 [#allocation5], 4
          %s176 = int_to_ptr.vmem [resolvable:$true] %s175
          %181 = dma.hbm_to_vmem [thread:$0]  %s174, 12288, %s176, [#allocation6], 128, 128, 8
        $region16: #{tpu_custom_call.1} parent=11 // pred_fallthru
          _
        // Predicated region
        $region17: #{tpu_custom_call.1} parent=11 // pred_check
          %p182 = pneg %p85
        $region18: #{tpu_custom_call.1} parent=11 // pred_check_branch
          %184 = sbr.rel (%p182) target = $region20
        $region19: #{tpu_custom_call.1} parent=11 // pred_region
          _
        $region20: #{tpu_custom_call.1} parent=11 // pred_fallthru
          _
        // Predicated region
        $region21: #{tpu_custom_call.1} parent=11 // pred_check
          %p185 = pneg %p106
        $region22: #{tpu_custom_call.1} parent=11 // pred_check_branch
          %187 = sbr.rel (%p185) target = $region24
        $region23: #{tpu_custom_call.1} parent=11 // pred_region
          _
        $region24: #{tpu_custom_call.1} parent=11 // pred_fallthru
          _
        // Predicated region
        $region25: #{tpu_custom_call.1} parent=11 // pred_check
          %p188 = pneg %p127
        $region26: #{tpu_custom_call.1} parent=11 // pred_check_branch
          %190 = sbr.rel (%p188) target = $region28
        $region27: #{tpu_custom_call.1} parent=11 // pred_region
          _
        $region28: #{tpu_custom_call.1} parent=11 // pred_fallthru
          _
      $region12: #{tpu_custom_call.1} parent=5 // pred_fallthru
        _
      %p191 = scmp.lt.s32.totalorder %s17, 2
      // Predicated region
      $region29: #{tpu_custom_call.1} parent=5 // pred_check
        %p192 = pneg %p191
      $region30: #{tpu_custom_call.1} parent=5 // pred_check_branch
        %194 = sbr.rel (%p192) target = $region32
      $region31: #{tpu_custom_call.1} parent=5 // pred_region
        // Predicated region
        $region33: #{tpu_custom_call.1} parent=31 // pred_check
          %p195 = pneg %p37
        $region34: #{tpu_custom_call.1} parent=31 // pred_check_branch
          %197 = sbr.rel (%p195) target = $region36
        $region35: #{tpu_custom_call.1} parent=31 // pred_region
          %s198 = sand.u32 %s27, 1
          %s199 = sand.u32 %s27, 1
          %s200 = smul.addr %s199, 48
          %s201 = scalar_lea.vmem [#allocation4], %s200
          %s202 = smul.addr %s17, 8
          %s203 = scalar_lea.vmem %s1, %s202
          // Predicated region
          $region37: #{tpu_custom_call.1} parent=35 // pred_check
            _
          $region38: #{tpu_custom_call.1} parent=35 // pred_check_branch
            %205 = sbr.rel (0) target = $region40
          $region39: #{tpu_custom_call.1} parent=35 // pred_region
            // Predicated region
            $region41: #{tpu_custom_call.1} parent=39 // pred_check
              _
            $region42: #{tpu_custom_call.1} parent=39 // pred_check_branch
              %207 = sbr.rel (0) target = $region44
            $region43: #{tpu_custom_call.1} parent=39 // pred_region
              // Predicated region
              $region56: #{tpu_custom_call.1} parent=43 // pred_check
                _
              $region57: #{tpu_custom_call.1} parent=43 // pred_check_branch
                %233 = sbr.rel (0) target = $region59
              $region58: #{tpu_custom_call.1} parent=43 // pred_region
                loop: start=0, step=1, limit=1
                $region60: #{tpu_custom_call.1} parent=58 // loop_pre_header
                  _
                $region61: #{tpu_custom_call.1} parent=58 // loop_header
                  %s235 = sphi 0, %s239
                  %p236 = scmp.ge.s32.totalorder %s235, 1
                  %s240 = sphi %s203, %s203
                  %s241 = sphi %s201, %s201
                $region62: #{tpu_custom_call.1} parent=58 // loop_header_branch
                  %238 = sbr.rel (%p236) target = $region66
                $region63: #{tpu_custom_call.1} parent=58 // loop_body
                  %v242 = vld [vmem:[%s240] sm:$0xff]
                  %243 = vst [vmem:[%s241] sm:$0xff] %v242
                  %v244 = vld [vmem:[%s240 + $0x10] sm:$0xff]
                  %245 = vst [vmem:[%s241 + $0x8] sm:$0xff] %v244
                  %v246 = vld [vmem:[%s240 + $0x20] sm:$0xff]
                  %247 = vst [vmem:[%s241 + $0x10] sm:$0xff] %v246
                  %v248 = vld [vmem:[%s240 + $0x30] sm:$0xff]
                  %249 = vst [vmem:[%s241 + $0x18] sm:$0xff] %v248
                  %v250 = vld [vmem:[%s240 + $0x40] sm:$0xff]
                  %251 = vst [vmem:[%s241 + $0x20] sm:$0xff] %v250
                  %v252 = vld [vmem:[%s240 + $0x50] sm:$0xff]
                  %253 = vst [vmem:[%s241 + $0x28] sm:$0xff] %v252
                $region64: #{tpu_custom_call.1} parent=58 // loop_footer
                  %s239 = sadd.s32 1, %s235
                $region65: #{tpu_custom_call.1} parent=58 // loop_footer_branch
                  %234 = sbr.rel target = $region61
                $region66: #{tpu_custom_call.1} parent=58 // loop_exit
                  _
              $region59: #{tpu_custom_call.1} parent=43 // pred_fallthru
                _
              // Predicated region
              $region67: #{tpu_custom_call.1} parent=43 // pred_check
                _
              $region68: #{tpu_custom_call.1} parent=43 // pred_check_branch
                %255 = sbr.rel target = $region70
              $region69: #{tpu_custom_call.1} parent=43 // pred_region
                _
              $region70: #{tpu_custom_call.1} parent=43 // pred_fallthru
                _
            $region44: #{tpu_custom_call.1} parent=39 // pred_fallthru
              _
            // Predicated region
            $region45: #{tpu_custom_call.1} parent=39 // pred_check
              _
            $region46: #{tpu_custom_call.1} parent=39 // pred_check_branch
              %209 = sbr.rel target = $region48
            $region47: #{tpu_custom_call.1} parent=39 // pred_region
              %s211 = ssub.s32 256, 1
              loop: start=0, step=1, limit=1
              $region49: #{tpu_custom_call.1} parent=47 // loop_pre_header
                _
              $region50: #{tpu_custom_call.1} parent=47 // loop_header
                %s213 = sphi 0, %s217
                %p214 = scmp.ge.s32.totalorder %s213, 1
                %s218 = sphi %s203, %s203
                %s219 = sphi %s201, %s201
              $region51: #{tpu_custom_call.1} parent=47 // loop_header_branch
                %216 = sbr.rel (%p214) target = $region55
              $region52: #{tpu_custom_call.1} parent=47 // loop_body
                %v220 = vld [vmem:[%s218] sm:%s211]
                %221 = vst [vmem:[%s219] sm:%s211] %v220
                %v222 = vld [vmem:[%s218 + $0x10] sm:%s211]
                %223 = vst [vmem:[%s219 + $0x8] sm:%s211] %v222
                %v224 = vld [vmem:[%s218 + $0x20] sm:%s211]
                %225 = vst [vmem:[%s219 + $0x10] sm:%s211] %v224
                %v226 = vld [vmem:[%s218 + $0x30] sm:%s211]
                %227 = vst [vmem:[%s219 + $0x18] sm:%s211] %v226
                %v228 = vld [vmem:[%s218 + $0x40] sm:%s211]
                %229 = vst [vmem:[%s219 + $0x20] sm:%s211] %v228
                %v230 = vld [vmem:[%s218 + $0x50] sm:%s211]
                %231 = vst [vmem:[%s219 + $0x28] sm:%s211] %v230
              $region53: #{tpu_custom_call.1} parent=47 // loop_footer
                %s217 = sadd.s32 1, %s213
              $region54: #{tpu_custom_call.1} parent=47 // loop_footer_branch
                %212 = sbr.rel target = $region50
              $region55: #{tpu_custom_call.1} parent=47 // loop_exit
                _
            $region48: #{tpu_custom_call.1} parent=39 // pred_fallthru
              _
          $region40: #{tpu_custom_call.1} parent=35 // pred_fallthru
            _
          %256 = vnop
        $region36: #{tpu_custom_call.1} parent=31 // pred_fallthru
          _
      $region32: #{tpu_custom_call.1} parent=5 // pred_fallthru
        _
      %p257 = scmp.le.s32.totalorder 1, %s17
      %p258 = scmp.lt.s32.totalorder %s17, 3
      %p259 = pnand %p257, %p258
      %p260 = pneg %p259
      // Predicated region
      $region71: #{tpu_custom_call.1} parent=5 // pred_check
        _
      $region72: #{tpu_custom_call.1} parent=5 // pred_check_branch
        %262 = sbr.rel (%p259) target = $region74
      $region73: #{tpu_custom_call.1} parent=5 // pred_region
        %s263 = ssub.s32 %s17, 1
        %s264 = sand.u32 %s30, 1
        %s265 = sand.u32 %s30, 1
        %s266 = smul.addr %s265, 48
        %s267 = scalar_lea.vmem [#allocation4], %s266
        // Predicated region
        $region75: #{tpu_custom_call.1} parent=73 // pred_check
          %p268 = pneg %p43
        $region76: #{tpu_custom_call.1} parent=73 // pred_check_branch
          %270 = sbr.rel (%p268) target = $region78
        $region77: #{tpu_custom_call.1} parent=73 // pred_region
          _
        $region78: #{tpu_custom_call.1} parent=73 // pred_fallthru
          _
        // Predicated region
        $region79: #{tpu_custom_call.1} parent=73 // pred_check
          %p271 = pneg %p64
        $region80: #{tpu_custom_call.1} parent=73 // pred_check_branch
          %273 = sbr.rel (%p271) target = $region82
        $region81: #{tpu_custom_call.1} parent=73 // pred_region
          %275 = dma.done [#allocation6], 12288
        $region82: #{tpu_custom_call.1} parent=73 // pred_fallthru
          _
        %s276 = sand.u32 %s30, 1
        %s277 = sand.u32 %s30, 1
        %s278 = smul.addr %s277, 48
        %s279 = scalar_lea.vmem [#allocation4], %s278
        %p280 = pneg %p43
        %p281 = pneg %p40
        %p282 = pneg %p64
        %p283 = pneg %p61
        %p284 = pneg %p85
        %p285 = pneg %p82
        %p286 = pneg %p106
        %p287 = pneg %p103
        %p288 = pneg %p127
        %p289 = pneg %p124
        %p290 = pneg %p153
        %p291 = pneg %p150
        %s292 = sand.u32 %s140, 1
        %s293 = scalar_lea.sflag [#allocation7], %s292
        %s294 = sand.u32 %s140, 1
        %s295 = smul.addr %s294, 8
        %s296 = scalar_lea.vmem [#allocation8], %s295
        %v297 = vlaneseq
        %v298 = vand.u32 %v297, 127
        %v299 = vld [vmem:[%s267] sm:$0xff]
        %300 = vset.pattern.permute.xlu0 0
        %301 = vperm.xlu0 %300, %v299
        %v302 = vpop.permute.xlu0 %301
        %vm303 = vcmp.eq.s32.totalorder %v298, %v302
        %s304 = scalar_lea.vmem %s267, 8 [#allocation4]
        %v305 = vld [vmem:[%s304] sm:$0xff]
        %306 = vset.pattern.permute.xlu0 0
        %307 = vperm.xlu0 %306, %v305
        %v308 = vpop.permute.xlu0 %307
        %vm309 = vcmp.eq.s32.totalorder %v298, %v308
        %s310 = scalar_lea.vmem %s267, 16 [#allocation4]
        %v311 = vld [vmem:[%s310] sm:$0xff]
        %vm312 = vcmp.ne.s32.totalorder %v311, 0
        %v313 = vsel %vm312, %v311, 4294967295
        %314 = vset.pattern.permute.xlu0 0
        %315 = vperm.xlu0 %314, %v313
        %v316 = vpop.permute.xlu0 %315
        %vm317 = vcmp.eq.s32.totalorder %v298, %v316
        %s318 = scalar_lea.vmem %s267, 24 [#allocation4]
        %v319 = vld [vmem:[%s318] sm:$0xff]
        %vm320 = vcmp.ne.s32.totalorder %v319, 0
        %v321 = vsel %vm320, %v319, 4294967295
        %322 = vset.pattern.permute.xlu0 0
        %323 = vperm.xlu0 %322, %v321
        %v324 = vpop.permute.xlu0 %323
        %vm325 = vcmp.eq.s32.totalorder %v298, %v324
        %s326 = scalar_lea.vmem %s267, 32 [#allocation4]
        %v327 = vld [vmem:[%s326] sm:$0xff]
        %vm328 = vcmp.ne.s32.totalorder %v327, 0
        %v329 = vsel %vm328, %v327, 4294967295
        %330 = vset.pattern.permute.xlu0 0
        %331 = vperm.xlu0 %330, %v329
        %v332 = vpop.permute.xlu0 %331
        %vm333 = vcmp.eq.s32.totalorder %v298, %v332
        %s334 = scalar_lea.vmem %s267, 40 [#allocation4]
        %v335 = vld [vmem:[%s334] sm:$0xff]
        %vm336 = vcmp.ne.s32.totalorder %v335, 0
        %v337 = vsel %vm336, %v335, 4294967295
        %338 = vset.pattern.permute.xlu0 0
        %339 = vperm.xlu0 %338, %v337
        %v340 = vpop.permute.xlu0 %339
        %vm341 = vcmp.eq.s32.totalorder %v298, %v340
        %v342 = vsel %vm303, 1, 0
        %v343 = vsel %vm309, 1, 0
        %v344 = vsel %vm317, 1, 0
        %v345 = vsel %vm325, 1, 0
        %v346 = vsel %vm333, 1, 0
        %v347 = vsel %vm341, 1, 0
        %v348 = vcvt.s32.f32 %v342
        %v349 = vcvt.s32.f32 %v343
        %v350 = vcvt.s32.f32 %v344
        %v351 = vcvt.s32.f32 %v345
        %v352 = vcvt.s32.f32 %v346
        %v353 = vcvt.s32.f32 %v347
        %v354 = vld [vmem:[#allocation5] sm:$0xff]
        %v355 = vld [vmem:[#allocation5 + $0x8] sm:$0xff]
        %v356 = vld [vmem:[#allocation5 + $0x10] sm:$0xff]
        %v357 = vld [vmem:[#allocation5 + $0x18] sm:$0xff]
        %v358 = vld [vmem:[#allocation5 + $0x20] sm:$0xff]
        %v359 = vld [vmem:[#allocation5 + $0x28] sm:$0xff]
        %v360 = vld [vmem:[#allocation5 + $0x30] sm:$0xff]
        %v361 = vld [vmem:[#allocation5 + $0x38] sm:$0xff]
        %v362 = vld [vmem:[#allocation5 + $0x40] sm:$0xff]
        %v363 = vld [vmem:[#allocation5 + $0x48] sm:$0xff]
        %v364 = vld [vmem:[#allocation5 + $0x50] sm:$0xff]
        %v365 = vld [vmem:[#allocation5 + $0x58] sm:$0xff]
        %v366 = vld [vmem:[#allocation5 + $0x60] sm:$0xff]
        %v367 = vld [vmem:[#allocation5 + $0x68] sm:$0xff]
        %v368 = vld [vmem:[#allocation5 + $0x70] sm:$0xff]
        %v369 = vld [vmem:[#allocation5 + $0x78] sm:$0xff]
        %v370 = vld [vmem:[#allocation5 + $0x80] sm:$0xff]
        %v371 = vld [vmem:[#allocation5 + $0x88] sm:$0xff]
        %v372 = vld [vmem:[#allocation5 + $0x90] sm:$0xff]
        %v373 = vld [vmem:[#allocation5 + $0x98] sm:$0xff]
        %v374 = vld [vmem:[#allocation5 + $0xa0] sm:$0xff]
        %v375 = vld [vmem:[#allocation5 + $0xa8] sm:$0xff]
        %v376 = vld [vmem:[#allocation5 + $0xb0] sm:$0xff]
        %v377 = vld [vmem:[#allocation5 + $0xb8] sm:$0xff]
        %v378 = vld [vmem:[#allocation5 + $0xc0] sm:$0xff]
        %v379 = vld [vmem:[#allocation5 + $0xc8] sm:$0xff]
        %v380 = vld [vmem:[#allocation5 + $0xd0] sm:$0xff]
        %v381 = vld [vmem:[#allocation5 + $0xd8] sm:$0xff]
        %v382 = vld [vmem:[#allocation5 + $0xe0] sm:$0xff]
        %v383 = vld [vmem:[#allocation5 + $0xe8] sm:$0xff]
        %v384 = vld [vmem:[#allocation5 + $0xf0] sm:$0xff]
        %v385 = vld [vmem:[#allocation5 + $0xf8] sm:$0xff]
        %v386 = vld [vmem:[#allocation5 + $0x100] sm:$0xff]
        %v387 = vld [vmem:[#allocation5 + $0x108] sm:$0xff]
        %v388 = vld [vmem:[#allocation5 + $0x110] sm:$0xff]
        %v389 = vld [vmem:[#allocation5 + $0x118] sm:$0xff]
        %v390 = vld [vmem:[#allocation5 + $0x120] sm:$0xff]
        %v391 = vld [vmem:[#allocation5 + $0x128] sm:$0xff]
        %v392 = vld [vmem:[#allocation5 + $0x130] sm:$0xff]
        %v393 = vld [vmem:[#allocation5 + $0x138] sm:$0xff]
        %v394 = vld [vmem:[#allocation5 + $0x140] sm:$0xff]
        %v395 = vld [vmem:[#allocation5 + $0x148] sm:$0xff]
        %v396 = vld [vmem:[#allocation5 + $0x150] sm:$0xff]
        %v397 = vld [vmem:[#allocation5 + $0x158] sm:$0xff]
        %v398 = vld [vmem:[#allocation5 + $0x160] sm:$0xff]
        %v399 = vld [vmem:[#allocation5 + $0x168] sm:$0xff]
        %v400 = vld [vmem:[#allocation5 + $0x170] sm:$0xff]
        %v401 = vld [vmem:[#allocation5 + $0x178] sm:$0xff]
        %v402 = vld [vmem:[#allocation5 + $0x180] sm:$0xff]
        %v403 = vld [vmem:[#allocation5 + $0x188] sm:$0xff]
        %v404 = vld [vmem:[#allocation5 + $0x190] sm:$0xff]
        %v405 = vld [vmem:[#allocation5 + $0x198] sm:$0xff]
        %v406 = vld [vmem:[#allocation5 + $0x1a0] sm:$0xff]
        %v407 = vld [vmem:[#allocation5 + $0x1a8] sm:$0xff]
        %v408 = vld [vmem:[#allocation5 + $0x1b0] sm:$0xff]
        %v409 = vld [vmem:[#allocation5 + $0x1b8] sm:$0xff]
        %v410 = vld [vmem:[#allocation5 + $0x1c0] sm:$0xff]
        %v411 = vld [vmem:[#allocation5 + $0x1c8] sm:$0xff]
        %v412 = vld [vmem:[#allocation5 + $0x1d0] sm:$0xff]
        %v413 = vld [vmem:[#allocation5 + $0x1d8] sm:$0xff]
        %v414 = vld [vmem:[#allocation5 + $0x1e0] sm:$0xff]
        %v415 = vld [vmem:[#allocation5 + $0x1e8] sm:$0xff]
        %v416 = vld [vmem:[#allocation5 + $0x1f0] sm:$0xff]
        %v417 = vld [vmem:[#allocation5 + $0x1f8] sm:$0xff]
        %v418 = vld [vmem:[#allocation5 + $0x200] sm:$0xff]
        %v419 = vld [vmem:[#allocation5 + $0x208] sm:$0xff]
        %v420 = vld [vmem:[#allocation5 + $0x210] sm:$0xff]
        %v421 = vld [vmem:[#allocation5 + $0x218] sm:$0xff]
        %v422 = vld [vmem:[#allocation5 + $0x220] sm:$0xff]
        %v423 = vld [vmem:[#allocation5 + $0x228] sm:$0xff]
        %v424 = vld [vmem:[#allocation5 + $0x230] sm:$0xff]
        %v425 = vld [vmem:[#allocation5 + $0x238] sm:$0xff]
        %v426 = vld [vmem:[#allocation5 + $0x240] sm:$0xff]
        %v427 = vld [vmem:[#allocation5 + $0x248] sm:$0xff]
        %v428 = vld [vmem:[#allocation5 + $0x250] sm:$0xff]
        %v429 = vld [vmem:[#allocation5 + $0x258] sm:$0xff]
        %v430 = vld [vmem:[#allocation5 + $0x260] sm:$0xff]
        %v431 = vld [vmem:[#allocation5 + $0x268] sm:$0xff]
        %v432 = vld [vmem:[#allocation5 + $0x270] sm:$0xff]
        %v433 = vld [vmem:[#allocation5 + $0x278] sm:$0xff]
        %v434 = vld [vmem:[#allocation5 + $0x280] sm:$0xff]
        %v435 = vld [vmem:[#allocation5 + $0x288] sm:$0xff]
        %v436 = vld [vmem:[#allocation5 + $0x290] sm:$0xff]
        %v437 = vld [vmem:[#allocation5 + $0x298] sm:$0xff]
        %v438 = vld [vmem:[#allocation5 + $0x2a0] sm:$0xff]
        %v439 = vld [vmem:[#allocation5 + $0x2a8] sm:$0xff]
        %v440 = vld [vmem:[#allocation5 + $0x2b0] sm:$0xff]
        %v441 = vld [vmem:[#allocation5 + $0x2b8] sm:$0xff]
        %v442 = vld [vmem:[#allocation5 + $0x2c0] sm:$0xff]
        %v443 = vld [vmem:[#allocation5 + $0x2c8] sm:$0xff]
        %v444 = vld [vmem:[#allocation5 + $0x2d0] sm:$0xff]
        %v445 = vld [vmem:[#allocation5 + $0x2d8] sm:$0xff]
        %v446 = vld [vmem:[#allocation5 + $0x2e0] sm:$0xff]
        %v447 = vld [vmem:[#allocation5 + $0x2e8] sm:$0xff]
        %v448 = vld [vmem:[#allocation5 + $0x2f0] sm:$0xff]
        %v449 = vld [vmem:[#allocation5 + $0x2f8] sm:$0xff]
        %s450 = sld [smem:[#allocation3]]
        %s451 = scalar_lea.vmem %s3, %s450
        %v452 = vld [vmem:[%s451] sm:$0x1]
        %v453 = vperm.slane %v452, 0
        %454 = vmatpush.msra.mxu0 %v369
        %455 = vmatpush.msra.mxu0 %v368
        %456 = vmatpush.msra.mxu0 %v367
        %457 = vmatpush.msra.mxu0 %v366
        %458 = vmatpush.msra.mxu0 %v365
        %459 = vmatpush.msra.mxu0 %v364
        %460 = vmatpush.msra.mxu0 %v363
        %461 = vmatpush.msra.mxu0 %v362
        %462 = vmatpush.msra.mxu0 %v361
        %463 = vmatpush.msra.mxu0 %v360
        %464 = vmatpush.msra.mxu0 %v359
        %465 = vmatpush.msra.mxu0 %v358
        %466 = vmatpush.msra.mxu0 %v357
        %467 = vmatpush.msra.mxu0 %v356
        %468 = vmatpush.msra.mxu0 %v355
        %469 = vmatpush.msra.mxu0 %v354
        %470 = vmatmul.f32.gmra.mxu0 %v348
        %v471 = vpop.f32.mrf.mxu0
        %v472 = vadd.f32 %v453, %v471
        %473 = vdwg.mxu0
        %474 = vmatpush.msra.mxu0 %v385
        %475 = vmatpush.msra.mxu0 %v384
        %476 = vmatpush.msra.mxu0 %v383
        %477 = vmatpush.msra.mxu0 %v382
        %478 = vmatpush.msra.mxu0 %v381
        %479 = vmatpush.msra.mxu0 %v380
        %480 = vmatpush.msra.mxu0 %v379
        %481 = vmatpush.msra.mxu0 %v378
        %482 = vmatpush.msra.mxu0 %v377
        %483 = vmatpush.msra.mxu0 %v376
        %484 = vmatpush.msra.mxu0 %v375
        %485 = vmatpush.msra.mxu0 %v374
        %486 = vmatpush.msra.mxu0 %v373
        %487 = vmatpush.msra.mxu0 %v372
        %488 = vmatpush.msra.mxu0 %v371
        %489 = vmatpush.msra.mxu0 %v370
        %490 = vmatmul.f32.gmra.mxu0 %v349
        %v491 = vpop.f32.mrf.mxu0
        %v492 = vadd.f32 %v472, %v491
        %493 = vdwg.mxu0
        %494 = vmatpush.msra.mxu0 %v401
        %495 = vmatpush.msra.mxu0 %v400
        %496 = vmatpush.msra.mxu0 %v399
        %497 = vmatpush.msra.mxu0 %v398
        %498 = vmatpush.msra.mxu0 %v397
        %499 = vmatpush.msra.mxu0 %v396
        %500 = vmatpush.msra.mxu0 %v395
        %501 = vmatpush.msra.mxu0 %v394
        %502 = vmatpush.msra.mxu0 %v393
        %503 = vmatpush.msra.mxu0 %v392
        %504 = vmatpush.msra.mxu0 %v391
        %505 = vmatpush.msra.mxu0 %v390
        %506 = vmatpush.msra.mxu0 %v389
        %507 = vmatpush.msra.mxu0 %v388
        %508 = vmatpush.msra.mxu0 %v387
        %509 = vmatpush.msra.mxu0 %v386
        %510 = vmatmul.f32.gmra.mxu0 %v350
        %v511 = vpop.f32.mrf.mxu0
        %v512 = vadd.f32 %v492, %v511
        %513 = vdwg.mxu0
        %514 = vmatpush.msra.mxu0 %v417
        %515 = vmatpush.msra.mxu0 %v416
        %516 = vmatpush.msra.mxu0 %v415
        %517 = vmatpush.msra.mxu0 %v414
        %518 = vmatpush.msra.mxu0 %v413
        %519 = vmatpush.msra.mxu0 %v412
        %520 = vmatpush.msra.mxu0 %v411
        %521 = vmatpush.msra.mxu0 %v410
        %522 = vmatpush.msra.mxu0 %v409
        %523 = vmatpush.msra.mxu0 %v408
        %524 = vmatpush.msra.mxu0 %v407
        %525 = vmatpush.msra.mxu0 %v406
        %526 = vmatpush.msra.mxu0 %v405
        %527 = vmatpush.msra.mxu0 %v404
        %528 = vmatpush.msra.mxu0 %v403
        %529 = vmatpush.msra.mxu0 %v402
        %530 = vmatmul.f32.gmra.mxu0 %v351
        %v531 = vpop.f32.mrf.mxu0
        %v532 = vadd.f32 %v512, %v531
        %533 = vdwg.mxu0
        %534 = vmatpush.msra.mxu0 %v433
        %535 = vmatpush.msra.mxu0 %v432
        %536 = vmatpush.msra.mxu0 %v431
        %537 = vmatpush.msra.mxu0 %v430
        %538 = vmatpush.msra.mxu0 %v429
        %539 = vmatpush.msra.mxu0 %v428
        %540 = vmatpush.msra.mxu0 %v427
        %541 = vmatpush.msra.mxu0 %v426
        %542 = vmatpush.msra.mxu0 %v425
        %543 = vmatpush.msra.mxu0 %v424
        %544 = vmatpush.msra.mxu0 %v423
        %545 = vmatpush.msra.mxu0 %v422
        %546 = vmatpush.msra.mxu0 %v421
        %547 = vmatpush.msra.mxu0 %v420
        %548 = vmatpush.msra.mxu0 %v419
        %549 = vmatpush.msra.mxu0 %v418
        %550 = vmatmul.f32.gmra.mxu0 %v352
        %v551 = vpop.f32.mrf.mxu0
        %v552 = vadd.f32 %v532, %v551
        %553 = vdwg.mxu0
        %554 = vmatpush.msra.mxu0 %v449
        %555 = vmatpush.msra.mxu0 %v448
        %556 = vmatpush.msra.mxu0 %v447
        %557 = vmatpush.msra.mxu0 %v446
        %558 = vmatpush.msra.mxu0 %v445
        %559 = vmatpush.msra.mxu0 %v444
        %560 = vmatpush.msra.mxu0 %v443
        %561 = vmatpush.msra.mxu0 %v442
        %562 = vmatpush.msra.mxu0 %v441
        %563 = vmatpush.msra.mxu0 %v440
        %564 = vmatpush.msra.mxu0 %v439
        %565 = vmatpush.msra.mxu0 %v438
        %566 = vmatpush.msra.mxu0 %v437
        %567 = vmatpush.msra.mxu0 %v436
        %568 = vmatpush.msra.mxu0 %v435
        %569 = vmatpush.msra.mxu0 %v434
        %570 = vmatmul.f32.gmra.mxu0 %v353
        %v571 = vpop.f32.mrf.mxu0
        %v572 = vadd.f32 %v552, %v571
        %573 = vdwg.mxu0
        %574 = vadd.xlane.f32.xlu0 %v572
        %v575 = vpop.xlane.xlu0 %574
        %v576 = vmul.f32 %v572, %v572
        %577 = vadd.xlane.f32.xlu0 %v576
        %v578 = vpop.xlane.xlu0 %577
        %v579 = vmul.f32 %v575, 0.0078125
        %v580 = vmul.f32 %v578, 0.0078125
        %v581 = vmul.f32 %v579, %v579
        %v582 = vsub.f32 %v580, %v581
        %v583 = vmax.f32 %v582, 0.0
        %v584 = vsub.f32 %v572, %v579
        %v585 = vadd.f32 %v583, 1e-12
        %v586 = vrsqrt.pop %v585
        %v587 = vmul.f32 %v586, %v585
        %v588 = vmul.f32 %v587, %v586
        %v589 = vmul.f32 0.5, %v588
        %v590 = vsub.f32 1.5, %v589
        %v591 = vmul.f32 %v586, %v590
        %vm592 = vweird.f32 %v585
        %vm593 = vweird.f32 %v586
        %vm594 = vmor %vm592, %vm593
        %v595 = vsel %vm594, %v586, %v591
        %v596 = vmul.f32 %v584, %v595
        %v597 = vld [vmem:[%s4] sm:$0x1]
        %v599 = vperm.slane %v597, 0
        %v601 = vmul.f32 %v596, %v599
        %v602 = vld [vmem:[%s5] sm:$0x1]
        %v604 = vperm.slane %v602, 0
        %v606 = vadd.f32 %v601, %v604
        %607 = vst [vmem:[%s296] sm:$0xff] %v606
        %s608 = sand.u32 %s140, 1
        %s609 = scalar_lea.sflag [#allocation7], %s608
        %s610 = sand.u32 %s140, 1
        %s611 = smul.addr %s610, 8
        %s612 = scalar_lea.vmem [#allocation8], %s611
        // Predicated region
        $region83: #{tpu_custom_call.1} parent=73 // pred_check
          %p613 = pneg %p150
        $region84: #{tpu_custom_call.1} parent=73 // pred_check_branch
          %615 = sbr.rel (%p613) target = $region86
        $region85: #{tpu_custom_call.1} parent=73 // pred_region
          %617 = vsyncadd %s609, 0
          %s618 = smul.addr %s22, 8
          %s619 = scalar_lea.hbm %s6, %s618
          %s621 = sshll.u32 %s612, 4
          %s622 = int_to_ptr.vmem [resolvable:$true] %s621
          %s623 = sshll.u32 %s619, 4
          %s624 = int_to_ptr.hbm [resolvable:$true] %s623
          %626 = dma.vmem_to_hbm [thread:$0]  %s622, 128, %s624, %s609
        $region86: #{tpu_custom_call.1} parent=73 // pred_fallthru
          _
      $region74: #{tpu_custom_call.1} parent=5 // pred_fallthru
        _
      %p627 = scmp.le.s32.totalorder 2, %s17
      // Predicated region
      $region87: #{tpu_custom_call.1} parent=5 // pred_check
        %p628 = pneg %p627
      $region88: #{tpu_custom_call.1} parent=5 // pred_check_branch
        %630 = sbr.rel (%p628) target = $region90
      $region89: #{tpu_custom_call.1} parent=5 // pred_region
        %s631 = ssub.s32 %s17, 2
        // Predicated region
        $region91: #{tpu_custom_call.1} parent=89 // pred_check
          %p632 = pneg %p156
        $region92: #{tpu_custom_call.1} parent=89 // pred_check_branch
          %634 = sbr.rel (%p632) target = $region94
        $region93: #{tpu_custom_call.1} parent=89 // pred_region
          %s635 = sand.u32 %s141, 1
          %s636 = scalar_lea.sflag [#allocation7], %s635
          %s637 = sand.u32 %s141, 1
          %s638 = smul.addr %s637, 8
          %s639 = scalar_lea.vmem [#allocation8], %s638
          %641 = dma.done %s636, 128
        $region94: #{tpu_custom_call.1} parent=89 // pred_fallthru
          _
      $region90: #{tpu_custom_call.1} parent=5 // pred_fallthru
        _
    $region6: #{tpu_custom_call.1} parent=1 // loop_footer
      %s21 = sadd.s32 1, %s17
    $region7: #{tpu_custom_call.1} parent=1 // loop_footer_branch
      %16 = sbr.rel target = $region3
    $region8: #{tpu_custom_call.1} parent=1 // loop_exit
      _
    %642 = vsyncpa [#allocation6], 1
    %s643 = scalar_lea.sflag [#allocation6], 1
    %644 = vsyncpa %s643, 1
    %645 = vsyncpa [#allocation7], 1
    %s646 = scalar_lea.sflag [#allocation7], 1
    %647 = vsyncpa %s646, 1

</llo_original>
